<compile_context>
chip_gen: v7x
topology: tpu7x:2x2x1
jax: 0.10.0
libtpu: 0.0.40
codegen_flags: <defaults>
</compile_context>

<pallas_src>
import functools

import jax
import jax.numpy as jnp
from jax.experimental import pallas as pl
from jax.experimental.pallas import tpu as pltpu


def _round_up(n, m):
    return ((n + m - 1) // m) * m


def _conv_mlp_kernel(x_ref, *refs, silu_flags):
    """Fused ConvMLP on one spatial tile.

    x_ref: (1, C_in, T); refs = (w_0, b_0, ..., w_{L-1}, b_{L-1}, o_ref)
      w_i: (C_{i+1}, C_i) native dtype, b_i: (C_{i+1}, 1) f32,
      o_ref: (1, C_out, T).
    The chained activation stays on-chip between layers (never hits HBM).
    """
    o_ref = refs[-1]
    h = x_ref[0]                                              # (C_in, T)
    for i, apply_silu in enumerate(silu_flags):
        w = refs[2 * i][...]                                  # (C_out_i, C_in_i)
        b = refs[2 * i + 1][...]                              # (C_out_i, 1) f32
        y = jnp.dot(w, h.astype(w.dtype),
                    preferred_element_type=jnp.float32)       # MXU, f32 accumulate
        y = y + b                                             # broadcast over lanes
        if apply_silu:
            y = y * jax.nn.sigmoid(y)                         # fused SiLU in f32
        h = y
    o_ref[0] = h.astype(o_ref.dtype)


def _vmem_cap_bytes():
    """~70% of physical per-core VMEM (Mosaic scratch headroom).

    Falls back to a v7x-safe assumption (64 MiB physical) if unqueryable, which
    is merely conservative on v5e/v6e (128 MiB).
    """
    phys = 64 << 20
    try:
        phys = int(pltpu.get_tpu_info().vmem_capacity_bytes)
    except Exception:
        pass
    return int(phys * 0.70)


def conv_mlp_pallas(x_nchw, params, *, tile_hw=4096):
    """Fused ConvMLP forward (stack of pointwise Conv2d [+ SiLU]) in one kernel.

    x_nchw: (B, C_in, H, W)
    params: list of (weight (C_out, C_in), bias (C_out,), apply_silu)
    Returns (B, C_out_last, H, W) in x's dtype.
    """
    B, C_in, H, W = x_nchw.shape
    HW = H * W
    assert params, "ConvMLP needs at least one layer"
    assert params[0][0].shape[1] == C_in, "weight / input channel mismatch"
    for (wp, _, _), (wn, _, _) in zip(params, params[1:]):
        assert wn.shape[1] == wp.shape[0], "layer channel chain mismatch"

    dims = [C_in] + [w.shape[0] for (w, _, _) in params]
    C_out = dims[-1]
    max_c = max(dims)
    silu_flags = tuple(bool(a) for (_, _, a) in params)
    x_itemsize = jnp.dtype(x_nchw.dtype).itemsize

    # ---- VMEM budget -> lane-dense spatial tile (multiple of 128) ----------
    cap = _vmem_cap_bytes()
    # Resident weights + biases (x2 buffering headroom; constant index_map so
    # they are only DMA'd once).
    fixed = 2 * sum(w.size * jnp.dtype(w.dtype).itemsize + w.shape[0] * 4
                    for (w, _, _) in params)
    # Per spatial lane: double-buffered x / out tiles plus the in-kernel f32
    # matmul result / SiLU temporaries (counted generously at 3 * max_c).
    per_lane = 2 * C_in * x_itemsize + 2 * C_out * x_itemsize + 3 * max_c * 4
    avail = cap - fixed - (4 << 20)            # 4 MiB slack for internal scratch
    tile_max = max(128, (avail // per_lane) // 128 * 128)

    if HW < 128:
        tile = HW                               # block == full dim (allowed)
    else:
        tile = min(_round_up(tile_hw, 128), _round_up(HW, 128), tile_max)

    grid_hw = pl.cdiv(HW, tile)
    # v7x has 2 TensorCores: ensure a "parallel" axis has >= 2 steps.
    if B * grid_hw < 2 and HW >= 256:
        tile = _round_up(pl.cdiv(HW, 2), 128)
        grid_hw = pl.cdiv(HW, tile)

    need = fixed + per_lane * tile
    vmem_limit = int(min(cap, max(32 << 20, 2 * need)))

    x_flat = x_nchw.reshape(B, C_in, HW)        # free reshape; NO pad / slice
    biases = [b.astype(jnp.float32).reshape(-1, 1) for (_, b, _) in params]

    in_specs = [pl.BlockSpec((1, C_in, tile), lambda b, j: (b, 0, j))]
    wb_inputs = []
    for (w, _, _), bb in zip(params, biases):
        co, ci = w.shape
        in_specs.append(pl.BlockSpec((co, ci), lambda b, j: (0, 0)))  # resident
        in_specs.append(pl.BlockSpec((co, 1), lambda b, j: (0, 0)))   # resident
        wb_inputs.extend([w, bb])

    out = pl.pallas_call(
        functools.partial(_conv_mlp_kernel, silu_flags=silu_flags),
        out_shape=jax.ShapeDtypeStruct((B, C_out, HW), x_nchw.dtype),
        grid_spec=pltpu.PrefetchScalarGridSpec(
            num_scalar_prefetch=0,
            grid=(B, grid_hw),
            in_specs=in_specs,
            out_specs=pl.BlockSpec((1, C_out, tile), lambda b, j: (b, 0, j)),
        ),
        compiler_params=pltpu.CompilerParams(
            dimension_semantics=("parallel", "parallel"),
            vmem_limit_bytes=vmem_limit,
        ),
    )(x_flat, *wb_inputs)

    return out.reshape(B, C_out, H, W)


def init_conv_mlp_params(key, *, in_dim=None, h_dim=None, out_dim=None,
                         layers=1, kernel=1, dtype=jnp.float32):
    """Mirror ConvMLP.__init__ layer structure (kernel=1 path).

    Returns a list of (weight (C_out, C_in), bias (C_out,), apply_silu).
    """
    if h_dim is not None and in_dim is None and out_dim is None:
        in_dim = out_dim = h_dim
    if in_dim is None or out_dim is None:
        raise ValueError("in_dim and out_dim must be provided when h_dim is not set")
    if kernel % 2 == 0:
        raise ValueError("kernel size must be odd")
    if kernel != 1:
        # TODO(synk): kernel>1 spatial Conv2d (halo / shifted-accumulation conv) not implemented in Pallas.
        raise NotImplementedError("only the kernel=1 (pointwise) ConvMLP path is implemented")

    if layers == 1:
        shapes = [(in_dim, out_dim, True)]                      # Conv + SiLU
    else:
        assert h_dim is not None, "h_dim must be provided when layers > 1"
        shapes = []
        for i in range(layers):
            if i == 0:
                shapes.append((in_dim, h_dim, True))            # Conv + SiLU
            elif i == layers - 1:
                shapes.append((h_dim, out_dim, False))          # Conv (no act)
            else:
                shapes.append((h_dim, h_dim, True))             # Conv + SiLU

    params = []
    for (cin, cout, act) in shapes:
        key, kw, kb = jax.random.split(key, 3)
        w = (jax.random.normal(kw, (cout, cin), dtype=jnp.float32)
             * (cin ** -0.5)).astype(dtype)
        b = jax.random.normal(kb, (cout,), dtype=jnp.float32) * 0.02
        params.append((w, b, act))
    return params


def conv_mlp_forward(x_nchw, params, *, tile_hw=4096):
    """ConvMLP.forward: whole layer stack in a single fused Pallas kernel."""
    return conv_mlp_pallas(x_nchw, params, tile_hw=tile_hw)


def conv_mlp_reference(x_nchw, params):
    """Plain-JAX f32 reference matching the PyTorch module."""
    h = x_nchw.astype(jnp.float32)
    for (w, b, act) in params:
        h = (jnp.einsum("oc,bchw->bohw", w.astype(jnp.float32), h)
             + b.astype(jnp.float32)[None, :, None, None])
        if act:
            h = h * jax.nn.sigmoid(h)
    return h


if __name__ == "__main__":
    key = jax.random.PRNGKey(0)
    kx, kp1, kp2 = jax.random.split(key, 3)

    B, h_dim, H, W = 2, 32, 16, 16                 # HW = 256 (>= 128 lanes)
    x = jax.random.normal(kx, (B, h_dim, H, W), dtype=jnp.float32)

    # Case 1: default ConvMLP(h_dim=32) -> Conv2d(32, 32, k=1) + SiLU
    params1 = init_conv_mlp_params(kp1, h_dim=h_dim)
    out1 = conv_mlp_forward(x, params1)
    jax.block_until_ready(out1)
    ref1 = conv_mlp_reference(x, params1)
    assert out1.shape == (B, h_dim, H, W)
    assert jnp.allclose(out1, ref1, atol=1e-4, rtol=1e-4)

    # Case 2: ConvMLP(in_dim=32, h_dim=64, out_dim=16, layers=3), fully fused.
    params2 = init_conv_mlp_params(kp2, in_dim=h_dim, h_dim=64, out_dim=16, layers=3)
    out2 = conv_mlp_forward(x, params2)
    jax.block_until_ready(out2)
    ref2 = conv_mlp_reference(x, params2)
    assert out2.shape == (B, 16, H, W)
    assert jnp.allclose(out2, ref2, atol=1e-4, rtol=1e-4)

    print("KERNEL_OK")
</pallas_src>

<mosaic_0001>
module attributes {stable_mosaic.version = 11 : i64} {
  func.func @_conv_mlp_kernel(%arg0: i32, %arg1: i32, %arg2: memref<1x32x256xf32, #tpu.memory_space<vmem>>, %arg3: memref<32x32xf32, #tpu.memory_space<vmem>>, %arg4: memref<32x1xf32, #tpu.memory_space<vmem>>, %arg5: memref<1x32x256xf32, #tpu.memory_space<vmem>>) attributes {dimension_semantics = [#tpu.dimension_semantics<parallel>, #tpu.dimension_semantics<parallel>], iteration_bounds = array<i64: 2, 1>, scalar_prefetch = 0 : i64, scratch_operands = 0 : i64, tpu.core_type = #tpu.core_type<tc>, window_params = [{transform_indices = @transform_0, window_bounds = array<i64: 1, 32, 256>}, {pipeline_mode = #tpu.pipeline_mode<synchronous>, transform_indices = @transform_1, window_bounds = array<i64: 32, 32>}, {pipeline_mode = #tpu.pipeline_mode<synchronous>, transform_indices = @transform_2, window_bounds = array<i64: 32, 1>}, {transform_indices = @transform_3, window_bounds = array<i64: 1, 32, 256>}]} {
    %c0 = arith.constant 0 : index
    %c0_0 = arith.constant 0 : index
    %c0_1 = arith.constant 0 : index
    %0 = vector.load %arg2[%c0, %c0_0, %c0_1] : memref<1x32x256xf32, #tpu.memory_space<vmem>>, vector<1x32x256xf32>
    %1 = vector.shape_cast %0 : vector<1x32x256xf32> to vector<32x256xf32>
    %c0_2 = arith.constant 0 : index
    %c0_3 = arith.constant 0 : index
    %2 = vector.load %arg3[%c0_2, %c0_3] : memref<32x32xf32, #tpu.memory_space<vmem>>, vector<32x32xf32>
    %c0_4 = arith.constant 0 : index
    %c0_5 = arith.constant 0 : index
    %3 = vector.load %arg4[%c0_4, %c0_5] : memref<32x1xf32, #tpu.memory_space<vmem>>, vector<32x1xf32>
    %cst = arith.constant dense<0.000000e+00> : vector<32x256xf32>
    %4 = tpu.matmul %2, %1, %cst {dimension_numbers = #tpu.dot_dimension_numbers<[1], [0], [0], [1], [0, 0, 1, 1], [], []>} : vector<32x32xf32>, vector<32x256xf32>, vector<32x256xf32> -> vector<32x256xf32>
    %5 = vector.broadcast %3 : vector<32x1xf32> to vector<32x256xf32>
    %6 = arith.addf %4, %5 : vector<32x256xf32>
    %7 = arith.negf %6 : vector<32x256xf32>
    %8 = math.exp %7 : vector<32x256xf32>
    %cst_6 = arith.constant 1.000000e+00 : f32
    %9 = vector.broadcast %cst_6 : f32 to vector<32x256xf32>
    %10 = arith.addf %9, %8 : vector<32x256xf32>
    %11 = arith.divf %9, %10 : vector<32x256xf32>
    %12 = arith.mulf %6, %11 : vector<32x256xf32>
    %c0_7 = arith.constant 0 : index
    %c0_8 = arith.constant 0 : index
    %c0_9 = arith.constant 0 : index
    %13 = vector.load %arg5[%c0_7, %c0_8, %c0_9] : memref<1x32x256xf32, #tpu.memory_space<vmem>>, vector<1x32x256xf32>
    %14 = vector.shape_cast %13 : vector<1x32x256xf32> to vector<32x256xf32>
    %15 = vector.shape_cast %12 : vector<32x256xf32> to vector<1x32x256xf32>
    tpu.vector_store %arg5[%c0_7, %c0_8, %c0_9], %15 {strides = array<i32>} : memref<1x32x256xf32, #tpu.memory_space<vmem>>, vector<1x32x256xf32>,
    return
  }
  func.func @transform_0(%arg0: i32, %arg1: i32) -> (i32, i32, i32) {
    %c0_i32 = arith.constant 0 : i32
    %c0_i32_0 = arith.constant 0 : i32
    return %arg0, %c0_i32, %arg1 : i32, i32, i32
  }
  func.func @transform_1(%arg0: i32, %arg1: i32) -> (i32, i32) {
    %c0_i32 = arith.constant 0 : i32
    %c0_i32_0 = arith.constant 0 : i32
    %c0_i32_1 = arith.constant 0 : i32
    return %c0_i32, %c0_i32_0 : i32, i32
  }
  func.func @transform_2(%arg0: i32, %arg1: i32) -> (i32, i32) {
    %c0_i32 = arith.constant 0 : i32
    %c0_i32_0 = arith.constant 0 : i32
    %c0_i32_1 = arith.constant 0 : i32
    return %c0_i32, %c0_i32_0 : i32, i32
  }
  func.func @transform_3(%arg0: i32, %arg1: i32) -> (i32, i32, i32) {
    %c0_i32 = arith.constant 0 : i32
    %c0_i32_0 = arith.constant 0 : i32
    return %arg0, %c0_i32, %arg1 : i32, i32, i32
  }
}

</mosaic_0001>

<llo_original>
// kernel: tpu_custom_call.1
$region0: #{tpu_custom_call.1}
  #allocation0 [shape = 'u32[]', space=smem, size = 0x4, offset = 0x4, fixed_abs, tag = 'smem constant byte address 0x4 - core index']
  #allocation1 [shape = 'u32[144,128]{1,0:T(1,128)}', space=vmem, size = 0x12000, scoped, tag = 'internal scratch']
  %s0 = inlined_call_operand.hbm [shape: f32[2,32,256], index: 0, kind: input, shape index: {}]
  %s1 = inlined_call_operand.vmem [shape: f32[32,32], index: 1, kind: input, shape index: {}]
  %s2 = inlined_call_operand.vmem [shape: f32[32,1], index: 2, kind: input, shape index: {}]
  %s3 = inlined_call_operand.hbm [shape: f32[2,32,256], index: 3, kind: output, shape index: {}]
  %s4 = sld [smem:[#allocation0]]
  $region49: #{tpu_custom_call.1} parent=0
    _
  %s6 = ssub.s32 1, %s4
  %s7 = scalar_select 0, %s6, %s4
  $region1: #{tpu_custom_call.1} parent=0
    #allocation2 [shape = 'u8[65536]{0}', space=vmem, size = 0x10000, scoped, tag = 'input window, operand 0']
    #allocation3 [shape = 's32[2]{0}', space=sflag, size = 0x8, scoped, tag = 'scoped memory for tpu_custom_call.1']
    #allocation4 [shape = 's32[2]{0}', space=sflag, size = 0x8, scoped, tag = 'scoped memory for tpu_custom_call.1']
    #allocation5 [shape = 'u8[65536]{0}', space=vmem, size = 0x10000, scoped, tag = 'output window, operand 0']
    %8 = vsyncpa [#allocation3], 0
    %s9 = scalar_lea.sflag [#allocation3], 1
    %10 = vsyncpa %s9, 0
    %11 = vsyncpa [#allocation4], 0
    %s12 = scalar_lea.sflag [#allocation4], 1
    %13 = vsyncpa %s12, 0
    loop: start=0, step=1, limit=4
    $region2: #{tpu_custom_call.1} parent=1 // loop_pre_header
      _
    $region3: #{tpu_custom_call.1} parent=1 // loop_header
      %s15 = sphi 0, %s19
      %p16 = scmp.ge.s32.totalorder %s15, 4
      %s22 = sphi 0, %s34
      %s23 = sphi 0, %s30
      %s24 = sphi 0, %s22
      %s25 = sphi 0, %s23
      %s26 = sphi 0, %s24
      %s27 = sphi 0, %s25
      %s39 = sphi 0, %s41
      %s42 = sphi 0, %s39
      %s43 = sphi 0, %s42
      %s59 = sphi 0, %s43
      %s63 = sphi 0, %s63
      %s65 = sphi 0, %s63
      %s66 = sphi 0, %s65
      %s80 = sphi 0, %s66
      %s84 = sphi 0, %s84
      %s86 = sphi 0, %s84
      %s87 = sphi 0, %s86
      %s101 = sphi 0, %s87
      %s109 = sphi 0, %s111
      %s112 = sphi 0, %s109
      %s113 = sphi 0, %s112
      %s129 = sphi 0, %s113
    $region4: #{tpu_custom_call.1} parent=1 // loop_header_branch
      %18 = sbr.rel (%p16) target = $region8
    $region5: #{tpu_custom_call.1} parent=1 // loop_body
      %s20 = ssub.s32 %s15, 1
      %s21 = ssub.s32 %s15, 2
      %s28 = sadd.s32 1, %s23
      %p29 = scmp.ge.s32.totalorder %s28, 1
      %s30 = scalar_select %p29, 0, %s28
      %s31 = sadd.s32 1, %s22
      %s32 = scalar_select %p29, %s31, %s22
      %p33 = scmp.ge.s32.totalorder %s32, 2
      %s34 = scalar_select %p33, 0, %s32
      %s35 = ssub.s32 %s22, %s34
      %s36 = ssub.s32 %s23, %s30
      %s37 = sor.u32 %s35, %s36
      %p38 = scmp.eq.s32.totalorder %s37, 0
      %s40 = sadd.s32 %s39, 1
      %s41 = scalar_select %p38, %s39, %s40
      %p44 = pneg %p38
      %p45 = scmp.eq.s32.totalorder %s15, 1
      %p46 = por %p44, %p45
      %p47 = scmp.ne.s32.totalorder %s39, %s42
      %p48 = scmp.eq.s32.totalorder %s15, 0
      %p49 = por %p47, %p48
      %p50 = scmp.ne.s32.totalorder %s39, %s42
      %p51 = scmp.eq.s32.totalorder %s20, 1
      %p52 = por %p50, %p51
      %p53 = scmp.ne.s32.totalorder %s42, %s43
      %p54 = scmp.eq.s32.totalorder %s20, 0
      %p55 = por %p53, %p54
      %p56 = scmp.ne.s32.totalorder %s42, %s43
      %p57 = scmp.eq.s32.totalorder %s21, 1
      %p58 = por %p56, %p57
      %p60 = scmp.ne.s32.totalorder %s43, %s59
      %p61 = scmp.eq.s32.totalorder %s21, 0
      %p62 = por %p60, %p61
      %s64 = sadd.s32 %s63, 1
      %p67 = scmp.eq.s32.totalorder %s15, 1
      %p68 = scmp.ne.s32.totalorder %s63, %s65
      %p69 = scmp.eq.s32.totalorder %s15, 0
      %p70 = por %p68, %p69
      %p71 = scmp.ne.s32.totalorder %s63, %s65
      %p72 = scmp.eq.s32.totalorder %s20, 1
      %p73 = por %p71, %p72
      %p74 = scmp.ne.s32.totalorder %s65, %s66
      %p75 = scmp.eq.s32.totalorder %s20, 0
      %p76 = por %p74, %p75
      %p77 = scmp.ne.s32.totalorder %s65, %s66
      %p78 = scmp.eq.s32.totalorder %s21, 1
      %p79 = por %p77, %p78
      %p81 = scmp.ne.s32.totalorder %s66, %s80
      %p82 = scmp.eq.s32.totalorder %s21, 0
      %p83 = por %p81, %p82
      %s85 = sadd.s32 %s84, 1
      %p88 = scmp.eq.s32.totalorder %s15, 1
      %p89 = scmp.ne.s32.totalorder %s84, %s86
      %p90 = scmp.eq.s32.totalorder %s15, 0
      %p91 = por %p89, %p90
      %p92 = scmp.ne.s32.totalorder %s84, %s86
      %p93 = scmp.eq.s32.totalorder %s20, 1
      %p94 = por %p92, %p93
      %p95 = scmp.ne.s32.totalorder %s86, %s87
      %p96 = scmp.eq.s32.totalorder %s20, 0
      %p97 = por %p95, %p96
      %p98 = scmp.ne.s32.totalorder %s86, %s87
      %p99 = scmp.eq.s32.totalorder %s21, 1
      %p100 = por %p98, %p99
      %p102 = scmp.ne.s32.totalorder %s87, %s101
      %p103 = scmp.eq.s32.totalorder %s21, 0
      %p104 = por %p102, %p103
      %s105 = ssub.s32 %s22, %s34
      %s106 = ssub.s32 %s23, %s30
      %s107 = sor.u32 %s105, %s106
      %p108 = scmp.eq.s32.totalorder %s107, 0
      %s110 = sadd.s32 %s109, 1
      %s111 = scalar_select %p108, %s109, %s110
      %p114 = pneg %p108
      %p115 = scmp.eq.s32.totalorder %s15, 1
      %p116 = por %p114, %p115
      %p117 = scmp.ne.s32.totalorder %s109, %s112
      %p118 = scmp.eq.s32.totalorder %s15, 0
      %p119 = por %p117, %p118
      %p120 = scmp.ne.s32.totalorder %s109, %s112
      %p121 = scmp.eq.s32.totalorder %s20, 1
      %p122 = por %p120, %p121
      %p123 = scmp.ne.s32.totalorder %s112, %s113
      %p124 = scmp.eq.s32.totalorder %s20, 0
      %p125 = por %p123, %p124
      %p126 = scmp.ne.s32.totalorder %s112, %s113
      %p127 = scmp.eq.s32.totalorder %s21, 1
      %p128 = por %p126, %p127
      %p130 = scmp.ne.s32.totalorder %s113, %s129
      %p131 = scmp.eq.s32.totalorder %s21, 0
      %p132 = por %p130, %p131
      %p133 = scmp.le.s32.totalorder 1, %s15
      %p134 = scmp.lt.s32.totalorder %s15, 3
      %p135 = pnand %p133, %p134
      %p136 = pneg %p135
      // Predicated region
      $region9: #{tpu_custom_call.1} parent=5 // pred_check
        _
      $region10: #{tpu_custom_call.1} parent=5 // pred_check_branch
        %138 = sbr.rel (%p135) target = $region12
      $region11: #{tpu_custom_call.1} parent=5 // pred_region
        %s139 = ssub.s32 %s15, 1
        // Predicated region
        $region13: #{tpu_custom_call.1} parent=11 // pred_check
          %p140 = pneg %p76
        $region14: #{tpu_custom_call.1} parent=11 // pred_check_branch
          %142 = sbr.rel (%p140) target = $region16
        $region15: #{tpu_custom_call.1} parent=11 // pred_region
          _
        $region16: #{tpu_custom_call.1} parent=11 // pred_fallthru
          _
        // Predicated region
        $region17: #{tpu_custom_call.1} parent=11 // pred_check
          %p143 = pneg %p97
        $region18: #{tpu_custom_call.1} parent=11 // pred_check_branch
          %145 = sbr.rel (%p143) target = $region20
        $region19: #{tpu_custom_call.1} parent=11 // pred_region
          _
        $region20: #{tpu_custom_call.1} parent=11 // pred_fallthru
          _
      $region12: #{tpu_custom_call.1} parent=5 // pred_fallthru
        _
      %p146 = scmp.lt.s32.totalorder %s15, 2
      // Predicated region
      $region21: #{tpu_custom_call.1} parent=5 // pred_check
        %p147 = pneg %p146
      $region22: #{tpu_custom_call.1} parent=5 // pred_check_branch
        %149 = sbr.rel (%p147) target = $region24
      $region23: #{tpu_custom_call.1} parent=5 // pred_region
        // Predicated region
        $region25: #{tpu_custom_call.1} parent=23 // pred_check
          %p150 = pneg %p49
        $region26: #{tpu_custom_call.1} parent=23 // pred_check_branch
          %152 = sbr.rel (%p150) target = $region28
        $region27: #{tpu_custom_call.1} parent=23 // pred_region
          %s153 = sand.u32 %s39, 1
          %s154 = scalar_lea.sflag [#allocation3], %s153
          %s155 = sand.u32 %s39, 1
          %s156 = smul.addr %s155, 64
          %s157 = scalar_lea.vmem [#allocation2], %s156
          %s158 = smul.u32 2, %s23
          %s160 = ssub.s32 1024, 1024
          %161 = vsyncadd %s154, %s160
          %s162 = smul.addr %s22, 8
          %s163 = sadd.s32 %s158, %s162
          %s164 = smul.addr %s163, 128
          %s165 = scalar_lea.hbm %s0, %s164
          %s166 = sshll.u32 %s157, 4
          %s167 = int_to_ptr.vmem [resolvable:$true] %s166
          %172 = dma.hbm_to_vmem [thread:$0]  %s165, 1024, %s167, %s154, 256, 256, 16
        $region28: #{tpu_custom_call.1} parent=23 // pred_fallthru
          _
      $region24: #{tpu_custom_call.1} parent=5 // pred_fallthru
        _
      %p173 = scmp.le.s32.totalorder 1, %s15
      %p174 = scmp.lt.s32.totalorder %s15, 3
      %p175 = pnand %p173, %p174
      %p176 = pneg %p175
      // Predicated region
      $region29: #{tpu_custom_call.1} parent=5 // pred_check
        _
      $region30: #{tpu_custom_call.1} parent=5 // pred_check_branch
        %178 = sbr.rel (%p175) target = $region32
      $region31: #{tpu_custom_call.1} parent=5 // pred_region
        %s179 = ssub.s32 %s15, 1
        %s180 = sand.u32 %s42, 1
        %s181 = scalar_lea.sflag [#allocation3], %s180
        %s182 = sand.u32 %s42, 1
        %s183 = smul.addr %s182, 64
        %s184 = scalar_lea.vmem [#allocation2], %s183
        // Predicated region
        $region33: #{tpu_custom_call.1} parent=31 // pred_check
          %p185 = pneg %p55
        $region34: #{tpu_custom_call.1} parent=31 // pred_check_branch
          %187 = sbr.rel (%p185) target = $region36
        $region35: #{tpu_custom_call.1} parent=31 // pred_region
          %188 = dma.done %s181, 1024
        $region36: #{tpu_custom_call.1} parent=31 // pred_fallthru
          _
        %s189 = sand.u32 %s42, 1
        %s190 = scalar_lea.sflag [#allocation3], %s189
        %s191 = sand.u32 %s42, 1
        %s192 = smul.addr %s191, 64
        %s193 = scalar_lea.vmem [#allocation2], %s192
        %p194 = pneg %p55
        %p195 = pneg %p52
        %p196 = pneg %p76
        %p197 = pneg %p73
        %p198 = pneg %p97
        %p199 = pneg %p94
        %p200 = pneg %p125
        %p201 = pneg %p122
        %s202 = sand.u32 %s112, 1
        %s203 = scalar_lea.sflag [#allocation4], %s202
        %s204 = sand.u32 %s112, 1
        %s205 = smul.addr %s204, 64
        %s206 = scalar_lea.vmem [#allocation5], %s205
        %s207 = smul.u32 2, %s25
        %s208 = smul.u32 2, %s25
        %v209 = vld [vmem:[%s184] sm:$0xff]
        %v210 = vld [vmem:[%s184 + $0x8] sm:$0xff]
        %v211 = vld [vmem:[%s184 + $0x10] sm:$0xff]
        %v212 = vld [vmem:[%s184 + $0x18] sm:$0xff]
        %v213 = vld [vmem:[%s184 + $0x20] sm:$0xff]
        %v214 = vld [vmem:[%s184 + $0x28] sm:$0xff]
        %v215 = vld [vmem:[%s184 + $0x30] sm:$0xff]
        %v216 = vld [vmem:[%s184 + $0x38] sm:$0xff]
        %v217 = vld [vmem:[%s1] sm:$0xff]
        %v218 = vld [vmem:[%s1 + $0x8] sm:$0xff]
        %v219 = vld [vmem:[%s1 + $0x10] sm:$0xff]
        %v220 = vld [vmem:[%s1 + $0x18] sm:$0xff]
        %v221 = vld [vmem:[%s2] sm:$0xff]
        %v222 = vld [vmem:[%s2 + $0x8] sm:$0xff]
        %v223 = vld [vmem:[%s2 + $0x10] sm:$0xff]
        %v224 = vld [vmem:[%s2 + $0x18] sm:$0xff]
        %226 = vset.pattern.permute.xlu0 0
        %227 = vperm.xlu0 %226, %v221
        %v228 = vpop.permute.xlu0 %227
        %231 = vset.pattern.permute.xlu0 0
        %232 = vperm.xlu0 %231, %v222
        %v233 = vpop.permute.xlu0 %232
        %236 = vset.pattern.permute.xlu0 0
        %237 = vperm.xlu0 %236, %v223
        %v238 = vpop.permute.xlu0 %237
        %241 = vset.pattern.permute.xlu0 0
        %242 = vperm.xlu0 %241, %v224
        %v243 = vpop.permute.xlu0 %242
        %vm245 = vcmask 261120
        %v247 = vsel %vm245, %v217, 0
        %v250 = vsel %vm245, %v218, 0
        %v253 = vsel %vm245, %v219, 0
        %v256 = vsel %vm245, %v220, 0
        %258 = vmatprep.subr.mxu0 %v210
        %259 = vmatpush1.msra.mxu0 %v209
        %260 = vmatprep.subr.mxu0 %v212
        %261 = vmatpush1.msra.mxu0 %v211
        %262 = vmatprep.subr.mxu0 %v214
        %263 = vmatpush1.msra.mxu0 %v213
        %264 = vmatprep.subr.mxu0 %v216
        %265 = vmatpush1.msra.mxu0 %v215
        %266 = vmatprep.subr.mxu0 0.0
        %267 = vmatpush1.msra.mxu0 0.0
        %268 = vmatprep.subr.mxu0 0.0
        %269 = vmatpush1.msra.mxu0 0.0
        %270 = vmatprep.subr.mxu0 0.0
        %271 = vmatpush1.msra.mxu0 0.0
        %272 = vmatprep.subr.mxu0 0.0
        %273 = vmatpush1.msra.mxu0 0.0
        %274 = vmatprep.subr.mxu0 0.0
        %275 = vmatpush1.msra.mxu0 0.0
        %276 = vmatprep.subr.mxu0 0.0
        %277 = vmatpush1.msra.mxu0 0.0
        %278 = vmatprep.subr.mxu0 0.0
        %279 = vmatpush1.msra.mxu0 0.0
        %280 = vmatprep.subr.mxu0 0.0
        %281 = vmatpush1.msra.mxu0 0.0
        %282 = vmatprep.subr.mxu0 0.0
        %283 = vmatpush1.msra.mxu0 0.0
        %284 = vmatprep.subr.mxu0 0.0
        %285 = vmatpush1.msra.mxu0 0.0
        %286 = vmatprep.subr.mxu0 0.0
        %287 = vmatpush1.msra.mxu0 0.0
        %288 = vmatprep.subr.mxu0 0.0
        %289 = vmatpush1.msra.mxu0 0.0
        %290 = vmatprep.subr.mxu0 0.0
        %291 = vmatpush1.msra.mxu0 0.0
        %292 = vmatprep.subr.mxu0 0.0
        %293 = vmatpush1.msra.mxu0 0.0
        %294 = vmatprep.subr.mxu0 0.0
        %295 = vmatpush1.msra.mxu0 0.0
        %296 = vmatprep.subr.mxu0 0.0
        %297 = vmatpush1.msra.mxu0 0.0
        %298 = vmatprep.subr.mxu0 0.0
        %299 = vmatpush1.msra.mxu0 0.0
        %300 = vmatprep.subr.mxu0 0.0
        %301 = vmatpush1.msra.mxu0 0.0
        %302 = vmatprep.subr.mxu0 0.0
        %303 = vmatpush1.msra.mxu0 0.0
        %304 = vmatprep.subr.mxu0 0.0
        %305 = vmatpush1.msra.mxu0 0.0
        %306 = vmatprep.subr.mxu0 0.0
        %307 = vmatpush1.msra.mxu0 0.0
        %308 = vmatprep.subr.mxu0 0.0
        %309 = vmatpush1.msra.mxu0 0.0
        %310 = vmatprep.subr.mxu0 0.0
        %311 = vmatpush1.msra.mxu0 0.0
        %312 = vmatprep.subr.mxu0 0.0
        %313 = vmatpush1.msra.mxu0 0.0
        %314 = vmatprep.subr.mxu0 0.0
        %315 = vmatpush1.msra.mxu0 0.0
        %316 = vmatprep.subr.mxu0 0.0
        %317 = vmatpush1.msra.mxu0 0.0
        %318 = vmatprep.subr.mxu0 0.0
        %319 = vmatpush1.msra.mxu0 0.0
        %320 = vmatprep.subr.mxu0 0.0
        %321 = vmatpush1.msra.mxu0 0.0
        %322 = vmatprep.mubr.f32.mxu0 0.0
        %323 = vmatmul.mubr.f32.gmra.mrb[0].mxu0 %v247
        %v324 = vpop.f32.mrb[0].mxu0
        %v325 = vadd.f32 %v228, %v324
        %v326 = vpop.f32.mrb[0].mxu0
        %v327 = vadd.f32 %v228, %v326
        %328 = vmatprep.mubr.f32.mxu0 0.0
        %329 = vmatmul.mubr.f32.gmra.mrb[0].mxu0 %v250
        %v330 = vpop.f32.mrb[0].mxu0
        %v331 = vadd.f32 %v233, %v330
        %v332 = vpop.f32.mrb[0].mxu0
        %v333 = vadd.f32 %v233, %v332
        %334 = vmatprep.mubr.f32.mxu0 0.0
        %335 = vmatmul.mubr.f32.gmra.mrb[0].mxu0 %v253
        %v336 = vpop.f32.mrb[0].mxu0
        %v337 = vadd.f32 %v238, %v336
        %v338 = vpop.f32.mrb[0].mxu0
        %v339 = vadd.f32 %v238, %v338
        %340 = vmatprep.mubr.f32.mxu0 0.0
        %341 = vmatmul.mubr.f32.gmra.mrb[0].mxu0 %v256
        %v342 = vpop.f32.mrb[0].mxu0
        %v343 = vadd.f32 %v243, %v342
        %v344 = vpop.f32.mrb[0].mxu0
        %v345 = vadd.f32 %v243, %v344
        %346 = vdwg.mxu0
        %v347 = vxor.u32 %v325, 2147483648
        %v348 = vxor.u32 %v327, 2147483648
        %v349 = vxor.u32 %v331, 2147483648
        %v350 = vxor.u32 %v333, 2147483648
        %v351 = vxor.u32 %v337, 2147483648
        %v352 = vxor.u32 %v339, 2147483648
        %v353 = vxor.u32 %v343, 2147483648
        %v354 = vxor.u32 %v345, 2147483648
        %v355 = vmul.f32 %v347, 1.442695
        %v356 = vpow.pop %v355
        %v357 = vmul.f32 %v348, 1.442695
        %v358 = vpow.pop %v357
        %v359 = vmul.f32 %v349, 1.442695
        %v360 = vpow.pop %v359
        %v361 = vmul.f32 %v350, 1.442695
        %v362 = vpow.pop %v361
        %v363 = vmul.f32 %v351, 1.442695
        %v364 = vpow.pop %v363
        %v365 = vmul.f32 %v352, 1.442695
        %v366 = vpow.pop %v365
        %v367 = vmul.f32 %v353, 1.442695
        %v368 = vpow.pop %v367
        %v369 = vmul.f32 %v354, 1.442695
        %v370 = vpow.pop %v369
        %v371 = vadd.f32 %v356, 1.0
        %v372 = vadd.f32 %v358, 1.0
        %v373 = vadd.f32 %v360, 1.0
        %v374 = vadd.f32 %v362, 1.0
        %v375 = vadd.f32 %v364, 1.0
        %v376 = vadd.f32 %v366, 1.0
        %v377 = vadd.f32 %v368, 1.0
        %v378 = vadd.f32 %v370, 1.0
        %v379 = vrcp.pop %v371
        %v380 = vmul.f32 1.0, %v379
        %v381 = vrcp.pop %v372
        %v382 = vmul.f32 1.0, %v381
        %v383 = vrcp.pop %v373
        %v384 = vmul.f32 1.0, %v383
        %v385 = vrcp.pop %v374
        %v386 = vmul.f32 1.0, %v385
        %v387 = vrcp.pop %v375
        %v388 = vmul.f32 1.0, %v387
        %v389 = vrcp.pop %v376
        %v390 = vmul.f32 1.0, %v389
        %v391 = vrcp.pop %v377
        %v392 = vmul.f32 1.0, %v391
        %v393 = vrcp.pop %v378
        %v394 = vmul.f32 1.0, %v393
        %v395 = vmul.f32 %v325, %v380
        %v396 = vmul.f32 %v327, %v382
        %v397 = vmul.f32 %v331, %v384
        %v398 = vmul.f32 %v333, %v386
        %v399 = vmul.f32 %v337, %v388
        %v400 = vmul.f32 %v339, %v390
        %v401 = vmul.f32 %v343, %v392
        %v402 = vmul.f32 %v345, %v394
        %403 = vst [vmem:[%s206] sm:$0xff] %v395
        %404 = vst [vmem:[%s206 + $0x8] sm:$0xff] %v396
        %405 = vst [vmem:[%s206 + $0x10] sm:$0xff] %v397
        %406 = vst [vmem:[%s206 + $0x18] sm:$0xff] %v398
        %407 = vst [vmem:[%s206 + $0x20] sm:$0xff] %v399
        %408 = vst [vmem:[%s206 + $0x28] sm:$0xff] %v400
        %409 = vst [vmem:[%s206 + $0x30] sm:$0xff] %v401
        %410 = vst [vmem:[%s206 + $0x38] sm:$0xff] %v402
        %s411 = sand.u32 %s112, 1
        %s412 = scalar_lea.sflag [#allocation4], %s411
        %s413 = sand.u32 %s112, 1
        %s414 = smul.addr %s413, 64
        %s415 = scalar_lea.vmem [#allocation5], %s414
        // Predicated region
        $region37: #{tpu_custom_call.1} parent=31 // pred_check
          %p416 = pneg %p122
        $region38: #{tpu_custom_call.1} parent=31 // pred_check_branch
          %418 = sbr.rel (%p416) target = $region40
        $region39: #{tpu_custom_call.1} parent=31 // pred_region
          %s419 = smul.u32 2, %s25
          %s421 = ssub.s32 1024, 1024
          %422 = vsyncadd %s412, %s421
          %s423 = smul.addr %s24, 8
          %s424 = sadd.s32 %s419, %s423
          %s425 = smul.addr %s424, 128
          %s426 = scalar_lea.hbm %s3, %s425
          %s427 = sshll.u32 %s415, 4
          %s428 = int_to_ptr.vmem [resolvable:$true] %s427
          %433 = dma.vmem_to_hbm [thread:$0]  %s428, 1024, %s426, %s412, 256, 256, 16
        $region40: #{tpu_custom_call.1} parent=31 // pred_fallthru
          _
      $region32: #{tpu_custom_call.1} parent=5 // pred_fallthru
        _
      %p434 = scmp.le.s32.totalorder 2, %s15
      // Predicated region
      $region41: #{tpu_custom_call.1} parent=5 // pred_check
        %p435 = pneg %p434
      $region42: #{tpu_custom_call.1} parent=5 // pred_check_branch
        %437 = sbr.rel (%p435) target = $region44
      $region43: #{tpu_custom_call.1} parent=5 // pred_region
        %s438 = ssub.s32 %s15, 2
        // Predicated region
        $region45: #{tpu_custom_call.1} parent=43 // pred_check
          %p439 = pneg %p128
        $region46: #{tpu_custom_call.1} parent=43 // pred_check_branch
          %441 = sbr.rel (%p439) target = $region48
        $region47: #{tpu_custom_call.1} parent=43 // pred_region
          %s442 = sand.u32 %s113, 1
          %s443 = scalar_lea.sflag [#allocation4], %s442
          %s444 = sand.u32 %s113, 1
          %s445 = smul.addr %s444, 64
          %s446 = scalar_lea.vmem [#allocation5], %s445
          %447 = dma.done %s443, 1024
        $region48: #{tpu_custom_call.1} parent=43 // pred_fallthru
          _
      $region44: #{tpu_custom_call.1} parent=5 // pred_fallthru
        _
    $region6: #{tpu_custom_call.1} parent=1 // loop_footer
      %s19 = sadd.s32 1, %s15
    $region7: #{tpu_custom_call.1} parent=1 // loop_footer_branch
      %14 = sbr.rel target = $region3
    $region8: #{tpu_custom_call.1} parent=1 // loop_exit
      _
    %448 = vsyncpa [#allocation3], 1
    %s449 = scalar_lea.sflag [#allocation3], 1
    %450 = vsyncpa %s449, 1
    %451 = vsyncpa [#allocation4], 1
    %s452 = scalar_lea.sflag [#allocation4], 1
    %453 = vsyncpa %s452, 1

</llo_original>
